<compile_context>
chip_gen: v5e
topology: v5e:2x2
jax: 0.10.0
libtpu: 0.0.40
codegen_flags: <defaults>
</compile_context>

<pallas_src>
import jax
import jax.numpy as jnp
from jax import lax
from jax.experimental import pallas as pl
from jax.experimental.pallas import tpu as pltpu

EPS = 1e-5
NEG_SLOPE = 0.2
K, S, P = 4, 2, 1      # ConvTranspose2d kernel / stride / padding
LANE = 128


def _round_up(x, m):
    return (x + m - 1) // m * m


# ---------------- pass 1: per-phase conv tile (VMEM only) -> BatchNorm partial stats ----------------
def _stats_kernel(p_ref, w_ref, s_ref, ss_ref):
    # p_ref  : [1, tm, 4*Cin] bf16  phase-decomposed input patches (M tile)
    # w_ref  : [1, 4*Cin, Cp] bf16  per-phase sub-kernel
    # s_ref  : [1, 1, Cp]     f32   per-phase running sum   (revisited across M tiles)
    # ss_ref : [1, 1, Cp]     f32   per-phase running sumsq (revisited across M tiles)
    y = jnp.dot(p_ref[0], w_ref[0], preferred_element_type=jnp.float32)

    @pl.when(pl.program_id(1) == 0)
    def _():
        s_ref[...] = jnp.zeros_like(s_ref)
        ss_ref[...] = jnp.zeros_like(ss_ref)

    s_ref[0] = s_ref[0] + jnp.sum(y, axis=0, keepdims=True)
    ss_ref[0] = ss_ref[0] + jnp.sum(y * y, axis=0, keepdims=True)


# ---------------- pass 2: recompute conv tile + folded BatchNorm affine + LeakyReLU ----------------
def _conv_bn_lrelu_kernel(p_ref, w_ref, a_ref, c_ref, o_ref):
    # p_ref: [1, tm, 4*Cin] bf16; w_ref: [1, 4*Cin, Cp] bf16
    # a_ref/c_ref: [1, Cp] f32 (per-channel scale / shift); o_ref: [1, tm, Cp] f32
    y = jnp.dot(p_ref[0], w_ref[0], preferred_element_type=jnp.float32)
    z = y * a_ref[...] + c_ref[...]
    o_ref[0] = jnp.maximum(z, NEG_SLOPE * z)   # LeakyReLU(0.2)


def dcgan_upconv_forward(x_nchw, weight, bias, gamma, beta, *, tile_m=512):
    """x_nchw: [N, Cin, H, W]; weight: [Cin, Cout, 4, 4] (PyTorch ConvTranspose2d layout).

    `bias` (ConvTranspose2d bias) is accepted for interface parity but not applied — a constant
    per-channel shift is exactly removed by the BatchNorm mean subtraction.
    """
    del bias
    N, Cin, H, W = x_nchw.shape
    Cout = weight.shape[1]
    Hout, Wout = S * H, S * W
    M = N * H * W                        # output rows per stride phase
    KK = 4 * Cin                         # 4 taps per phase * Cin
    Cp = _round_up(Cout, LANE)           # lane-dense channel dim

    tm = _round_up(min(tile_m, _round_up(M, 8)), 8)
    M_pad = _round_up(M, tm)
    MT = M_pad // tm

    # ---- glue: phase decomposition (plain JAX, no zero-dilation, no 16-tap im2col) ----
    x = jnp.transpose(x_nchw, (0, 2, 3, 1)).astype(jnp.float32)       # NHWC
    x_pad = jnp.pad(x, ((0, 0), (1, 1), (1, 1), (0, 0)))              # [N, H+2, W+2, Cin]

    phase_patches, phase_weights = [], []
    for dy in range(2):
        for dx in range(2):
            taps, wrows = [], []
            for a in range(2):
                for b in range(2):
                    taps.append(x_pad[:, dy + a: dy + a + H, dx + b: dx + b + W, :])
                    wrows.append(weight[:, :, 3 - dy - 2 * a, 3 - dx - 2 * b])  # [Cin, Cout]
            phase_patches.append(jnp.concatenate(taps, axis=-1).reshape(M, KK))
            phase_weights.append(jnp.concatenate(wrows, axis=0))                # [KK, Cout]

    patches = jnp.stack(phase_patches, axis=0)                                   # [4, M, KK]
    patches = jnp.pad(patches, ((0, 0), (0, M_pad - M), (0, 0))).astype(jnp.bfloat16)
    w_mat = jnp.stack(phase_weights, axis=0).astype(jnp.float32)                 # [4, KK, Cout]
    w_mat = jnp.pad(w_mat, ((0, 0), (0, 0), (0, Cp - Cout))).astype(jnp.bfloat16)

    # ---- pass 1: tiled matmul (kept in VMEM) + per-phase sum / sumsq accumulation ----
    s, ss = pl.pallas_call(
        _stats_kernel,
        grid=(4, MT),
        in_specs=[
            pl.BlockSpec((1, tm, KK), lambda ph, m: (ph, m, 0)),
            pl.BlockSpec((1, KK, Cp), lambda ph, m: (ph, 0, 0)),
        ],
        out_specs=(
            pl.BlockSpec((1, 1, Cp), lambda ph, m: (ph, 0, 0)),
            pl.BlockSpec((1, 1, Cp), lambda ph, m: (ph, 0, 0)),
        ),
        out_shape=(
            jax.ShapeDtypeStruct((4, 1, Cp), jnp.float32),
            jax.ShapeDtypeStruct((4, 1, Cp), jnp.float32),
        ),
        compiler_params=pltpu.CompilerParams(
            dimension_semantics=("parallel", "arbitrary"),
            vmem_limit_bytes=32 * 1024 * 1024),
    )(patches, w_mat)

    # ---- glue: combine per-phase stats, fold BN into per-channel scale / shift ----
    cnt = jnp.float32(4 * M)                       # == N * Hout * Wout elements per channel
    mean = jnp.sum(s[:, 0, :], axis=0) / cnt
    var = jnp.maximum(jnp.sum(ss[:, 0, :], axis=0) / cnt - mean * mean, 0.0)
    gamma_p = jnp.pad(gamma.astype(jnp.float32), (0, Cp - Cout))
    beta_p = jnp.pad(beta.astype(jnp.float32), (0, Cp - Cout))
    a_vec = gamma_p * lax.rsqrt(var + EPS)
    c_vec = beta_p - mean * a_vec

    # ---- pass 2: recompute conv tile + fused normalize + LeakyReLU (lane-dense output) ----
    z = pl.pallas_call(
        _conv_bn_lrelu_kernel,
        grid=(4, MT),
        in_specs=[
            pl.BlockSpec((1, tm, KK), lambda ph, m: (ph, m, 0)),
            pl.BlockSpec((1, KK, Cp), lambda ph, m: (ph, 0, 0)),
            pl.BlockSpec((1, Cp), lambda ph, m: (0, 0)),
            pl.BlockSpec((1, Cp), lambda ph, m: (0, 0)),
        ],
        out_specs=pl.BlockSpec((1, tm, Cp), lambda ph, m: (ph, m, 0)),
        out_shape=jax.ShapeDtypeStruct((4, M_pad, Cp), jnp.float32),
        compiler_params=pltpu.CompilerParams(
            dimension_semantics=("parallel", "parallel"),
            vmem_limit_bytes=32 * 1024 * 1024),
    )(patches, w_mat, a_vec.reshape(1, Cp), c_vec.reshape(1, Cp))

    # ---- glue: interleave the 4 stride phases back and return NCHW ----
    z = z[:, :M, :Cout].reshape(2, 2, N, H, W, Cout)        # [dy, dx, N, H, W, C]
    z = jnp.transpose(z, (2, 3, 0, 4, 1, 5)).reshape(N, Hout, Wout, Cout)
    return jnp.transpose(z, (0, 3, 1, 2))                   # NCHW


def _reference(x_nchw, weight, bias, gamma, beta):
    # Pure-JAX f32 reference of the PyTorch semantics (transposed conv via lhs-dilated conv
    # with the flipped kernel, batch-stat BN, LeakyReLU).
    wf = jnp.flip(weight, axis=(2, 3))                 # [Cin, Cout, K, K]
    w_oihw = jnp.transpose(wf, (1, 0, 2, 3))           # [Cout, Cin, K, K]
    y = lax.conv_general_dilated(
        x_nchw.astype(jnp.float32), w_oihw.astype(jnp.float32),
        window_strides=(1, 1), padding=[(2, 2), (2, 2)], lhs_dilation=(2, 2),
        dimension_numbers=("NCHW", "OIHW", "NCHW"))
    y = y + bias.reshape(1, -1, 1, 1)
    mean = jnp.mean(y, axis=(0, 2, 3), keepdims=True)
    var = jnp.mean((y - mean) ** 2, axis=(0, 2, 3), keepdims=True)
    z = (y - mean) / jnp.sqrt(var + EPS) * gamma.reshape(1, -1, 1, 1) + beta.reshape(1, -1, 1, 1)
    return jnp.where(z >= 0.0, z, NEG_SLOPE * z)


if __name__ == "__main__":
    nin, nout = 4, 8
    N, H, W = 2, 16, 16

    key = jax.random.PRNGKey(0)
    kx, kw, kb, kg, kbe = jax.random.split(key, 5)
    x = jax.random.normal(kx, (N, nin, H, W), jnp.float32)
    weight = jax.random.normal(kw, (nin, nout, K, K), jnp.float32) * 0.1   # ConvTranspose2d weight
    bias = jax.random.normal(kb, (nout,), jnp.float32) * 0.1               # ConvTranspose2d bias
    gamma = 1.0 + 0.1 * jax.random.normal(kg, (nout,), jnp.float32)        # BatchNorm weight
    beta = 0.1 * jax.random.normal(kbe, (nout,), jnp.float32)              # BatchNorm bias

    # tile_m=128 so the multi-tile stats-accumulation path is exercised (M = 512 -> 4 M-tiles).
    out = jax.block_until_ready(dcgan_upconv_forward(x, weight, bias, gamma, beta, tile_m=128))
    assert out.shape == (N, nout, S * H, S * W), out.shape

    # Tight check vs. an f32 reference fed the same bf16-quantized inputs (isolates bf16 MXU cast).
    xq = x.astype(jnp.bfloat16).astype(jnp.float32)
    wq = weight.astype(jnp.bfloat16).astype(jnp.float32)
    ref_q = jax.block_until_ready(_reference(xq, wq, bias, gamma, beta))
    err_q = float(jnp.max(jnp.abs(out - ref_q)))
    assert jnp.allclose(out, ref_q, rtol=2e-3, atol=2e-3), err_q

    # Loose check vs. the full-precision f32 reference (bf16 matmul inputs -> ~1e-2 level error).
    ref = jax.block_until_ready(_reference(x, weight, bias, gamma, beta))
    err = float(jnp.max(jnp.abs(out - ref)))
    assert jnp.allclose(out, ref, rtol=1e-1, atol=1e-1), err

    print("KERNEL_OK")
</pallas_src>

<mosaic_0001>
module attributes {stable_mosaic.version = 11 : i64} {
  func.func @_stats_kernel(%arg0: i32, %arg1: i32, %arg2: memref<1x128x16xbf16, #tpu.memory_space<vmem>>, %arg3: memref<1x16x128xbf16, #tpu.memory_space<vmem>>, %arg4: memref<1x1x128xf32, #tpu.memory_space<vmem>>, %arg5: memref<1x1x128xf32, #tpu.memory_space<vmem>>) attributes {dimension_semantics = [#tpu.dimension_semantics<parallel>, #tpu.dimension_semantics<arbitrary>], iteration_bounds = array<i64: 4, 4>, scalar_prefetch = 0 : i64, scratch_operands = 0 : i64, tpu.core_type = #tpu.core_type<tc>, window_params = [{transform_indices = @transform_0, window_bounds = array<i64: 1, 128, 16>}, {transform_indices = @transform_1, window_bounds = array<i64: 1, 16, 128>}, {transform_indices = @transform_2, window_bounds = array<i64: 1, 1, 128>}, {transform_indices = @transform_3, window_bounds = array<i64: 1, 1, 128>}]} {
    %c0 = arith.constant 0 : index
    %c0_0 = arith.constant 0 : index
    %c0_1 = arith.constant 0 : index
    %0 = vector.load %arg2[%c0, %c0_0, %c0_1] : memref<1x128x16xbf16, #tpu.memory_space<vmem>>, vector<1x128x16xbf16>
    %1 = vector.shape_cast %0 : vector<1x128x16xbf16> to vector<128x16xbf16>
    %c0_2 = arith.constant 0 : index
    %c0_3 = arith.constant 0 : index
    %c0_4 = arith.constant 0 : index
    %2 = vector.load %arg3[%c0_2, %c0_3, %c0_4] : memref<1x16x128xbf16, #tpu.memory_space<vmem>>, vector<1x16x128xbf16>
    %3 = vector.shape_cast %2 : vector<1x16x128xbf16> to vector<16x128xbf16>
    %cst = arith.constant dense<0.000000e+00> : vector<128x128xf32>
    %4 = tpu.matmul %1, %3, %cst {dimension_numbers = #tpu.dot_dimension_numbers<[1], [0], [0], [1], [0, 0, 1, 1], [], []>} : vector<128x16xbf16>, vector<16x128xbf16>, vector<128x128xf32> -> vector<128x128xf32>
    %c0_i32 = arith.constant 0 : i32
    %5 = arith.cmpi eq, %arg1, %c0_i32 : i32
    %6 = arith.extui %5 : i1 to i32
    %c0_i32_5 = arith.constant 0 : i32
    %7 = arith.cmpi ne, %6, %c0_i32_5 : i32
    scf.if %7 {
      %cst_20 = arith.constant 0.000000e+00 : f32
      %25 = vector.broadcast %cst_20 : f32 to vector<1x1x128xf32>
      %c0_21 = arith.constant 0 : index
      %c0_22 = arith.constant 0 : index
      %c0_23 = arith.constant 0 : index
      %26 = vector.load %arg4[%c0_21, %c0_22, %c0_23] : memref<1x1x128xf32, #tpu.memory_space<vmem>>, vector<1x1x128xf32>
      tpu.vector_store %arg4[%c0_21, %c0_22, %c0_23], %25 {strides = array<i32>} : memref<1x1x128xf32, #tpu.memory_space<vmem>>, vector<1x1x128xf32>,
      %cst_24 = arith.constant 0.000000e+00 : f32
      %27 = vector.broadcast %cst_24 : f32 to vector<1x1x128xf32>
      %c0_25 = arith.constant 0 : index
      %c0_26 = arith.constant 0 : index
      %c0_27 = arith.constant 0 : index
      %28 = vector.load %arg5[%c0_25, %c0_26, %c0_27] : memref<1x1x128xf32, #tpu.memory_space<vmem>>, vector<1x1x128xf32>
      tpu.vector_store %arg5[%c0_25, %c0_26, %c0_27], %27 {strides = array<i32>} : memref<1x1x128xf32, #tpu.memory_space<vmem>>, vector<1x1x128xf32>,
    } else {
    }
    %c0_6 = arith.constant 0 : index
    %c0_7 = arith.constant 0 : index
    %c0_8 = arith.constant 0 : index
    %8 = vector.load %arg4[%c0_6, %c0_7, %c0_8] : memref<1x1x128xf32, #tpu.memory_space<vmem>>, vector<1x1x128xf32>
    %9 = vector.shape_cast %8 : vector<1x1x128xf32> to vector<1x128xf32>
    %cst_9 = arith.constant dense<0.000000e+00> : vector<128xf32>
    %10 = vector.multi_reduction <add>, %4, %cst_9 [0] : vector<128x128xf32> to vector<128xf32>
    %11 = vector.shape_cast %10 : vector<128xf32> to vector<1x128xf32>
    %12 = arith.addf %9, %11 : vector<1x128xf32>
    %c0_10 = arith.constant 0 : index
    %c0_11 = arith.constant 0 : index
    %c0_12 = arith.constant 0 : index
    %13 = vector.load %arg4[%c0_10, %c0_11, %c0_12] : memref<1x1x128xf32, #tpu.memory_space<vmem>>, vector<1x1x128xf32>
    %14 = vector.shape_cast %13 : vector<1x1x128xf32> to vector<1x128xf32>
    %15 = vector.shape_cast %12 : vector<1x128xf32> to vector<1x1x128xf32>
    tpu.vector_store %arg4[%c0_10, %c0_11, %c0_12], %15 {strides = array<i32>} : memref<1x1x128xf32, #tpu.memory_space<vmem>>, vector<1x1x128xf32>,
    %c0_13 = arith.constant 0 : index
    %c0_14 = arith.constant 0 : index
    %c0_15 = arith.constant 0 : index
    %16 = vector.load %arg5[%c0_13, %c0_14, %c0_15] : memref<1x1x128xf32, #tpu.memory_space<vmem>>, vector<1x1x128xf32>
    %17 = vector.shape_cast %16 : vector<1x1x128xf32> to vector<1x128xf32>
    %18 = arith.mulf %4, %4 : vector<128x128xf32>
    %cst_16 = arith.constant dense<0.000000e+00> : vector<128xf32>
    %19 = vector.multi_reduction <add>, %18, %cst_16 [0] : vector<128x128xf32> to vector<128xf32>
    %20 = vector.shape_cast %19 : vector<128xf32> to vector<1x128xf32>
    %21 = arith.addf %17, %20 : vector<1x128xf32>
    %c0_17 = arith.constant 0 : index
    %c0_18 = arith.constant 0 : index
    %c0_19 = arith.constant 0 : index
    %22 = vector.load %arg5[%c0_17, %c0_18, %c0_19] : memref<1x1x128xf32, #tpu.memory_space<vmem>>, vector<1x1x128xf32>
    %23 = vector.shape_cast %22 : vector<1x1x128xf32> to vector<1x128xf32>
    %24 = vector.shape_cast %21 : vector<1x128xf32> to vector<1x1x128xf32>
    tpu.vector_store %arg5[%c0_17, %c0_18, %c0_19], %24 {strides = array<i32>} : memref<1x1x128xf32, #tpu.memory_space<vmem>>, vector<1x1x128xf32>,
    return
  }
  func.func @transform_0(%arg0: i32, %arg1: i32) -> (i32, i32, i32) {
    %c0_i32 = arith.constant 0 : i32
    %c0_i32_0 = arith.constant 0 : i32
    return %arg0, %arg1, %c0_i32 : i32, i32, i32
  }
  func.func @transform_1(%arg0: i32, %arg1: i32) -> (i32, i32, i32) {
    %c0_i32 = arith.constant 0 : i32
    %c0_i32_0 = arith.constant 0 : i32
    %c0_i32_1 = arith.constant 0 : i32
    return %arg0, %c0_i32, %c0_i32_0 : i32, i32, i32
  }
  func.func @transform_2(%arg0: i32, %arg1: i32) -> (i32, i32, i32) {
    %c0_i32 = arith.constant 0 : i32
    %c0_i32_0 = arith.constant 0 : i32
    %c0_i32_1 = arith.constant 0 : i32
    return %arg0, %c0_i32, %c0_i32_0 : i32, i32, i32
  }
  func.func @transform_3(%arg0: i32, %arg1: i32) -> (i32, i32, i32) {
    %c0_i32 = arith.constant 0 : i32
    %c0_i32_0 = arith.constant 0 : i32
    %c0_i32_1 = arith.constant 0 : i32
    return %arg0, %c0_i32, %c0_i32_0 : i32, i32, i32
  }
}

</mosaic_0001>

<llo_original>
// kernel: tpu_custom_call.1
$region0: #{tpu_custom_call.1}
  #allocation0 [shape = 'u32[]', space=smem, size = 0x4, offset = 0x4, fixed_abs, tag = 'smem constant byte address 0x4 - core index']
  #allocation1 [shape = 'u32[72,128]{1,0:T(1,128)}', space=vmem, size = 0x9000, scoped, tag = 'internal scratch']
  %s0 = inlined_call_operand.vmem [shape: bf16[4,512,16], index: 0, kind: input, shape index: {}]
  %s1 = inlined_call_operand.vmem [shape: bf16[4,16,128], index: 1, kind: input, shape index: {}]
  %s2 = inlined_call_operand.hbm [shape: f32[4,1,128], index: 2, kind: output, shape index: {0}]
  %s3 = inlined_call_operand.hbm [shape: f32[4,1,128], index: 3, kind: output, shape index: {1}]
  %4 = xla_tuple %s2, %s3
  %s5 = sld [smem:[#allocation0]]
  $region53: #{tpu_custom_call.1} parent=0
    _
  %s7 = ssub.s32 1, %s5
  %s8 = scalar_select 0, %s7, %s5
  $region1: #{tpu_custom_call.1} parent=0
    #allocation2 [shape = 'u8[1024]{0}', space=vmem, size = 0x400, scoped, tag = 'output window, operand 0']
    #allocation3 [shape = 's32[2]{0}', space=sflag, size = 0x8, scoped, tag = 'scoped memory for tpu_custom_call.1']
    #allocation4 [shape = 'u8[1024]{0}', space=vmem, size = 0x400, scoped, tag = 'output window, operand 1']
    #allocation5 [shape = 's32[2]{0}', space=sflag, size = 0x8, scoped, tag = 'scoped memory for tpu_custom_call.1']
    %9 = vsyncpa [#allocation3], 0
    %s10 = scalar_lea.sflag [#allocation3], 1
    %11 = vsyncpa %s10, 0
    %12 = vsyncpa [#allocation5], 0
    %s13 = scalar_lea.sflag [#allocation5], 1
    %14 = vsyncpa %s13, 0
    loop: start=0, step=1, limit=18
    $region2: #{tpu_custom_call.1} parent=1 // loop_pre_header
      _
    $region3: #{tpu_custom_call.1} parent=1 // loop_header
      %s16 = sphi 0, %s20
      %p17 = scmp.ge.s32.totalorder %s16, 18
      %s23 = sphi 0, %s35
      %s24 = sphi 0, %s31
      %s25 = sphi 0, %s23
      %s26 = sphi 0, %s24
      %s27 = sphi 0, %s25
      %s28 = sphi 0, %s26
      %s40 = sphi 0, %s42
      %s43 = sphi 0, %s40
      %s44 = sphi 0, %s43
      %s60 = sphi 0, %s44
      %s66 = sphi 0, %s68
      %s69 = sphi 0, %s66
      %s70 = sphi 0, %s69
      %s86 = sphi 0, %s70
      %s92 = sphi 0, %s94
      %s95 = sphi 0, %s92
      %s96 = sphi 0, %s95
      %s112 = sphi 0, %s96
      %s118 = sphi 0, %s120
      %s121 = sphi 0, %s118
      %s122 = sphi 0, %s121
      %s138 = sphi 0, %s122
    $region4: #{tpu_custom_call.1} parent=1 // loop_header_branch
      %19 = sbr.rel (%p17) target = $region8
    $region5: #{tpu_custom_call.1} parent=1 // loop_body
      %s21 = ssub.s32 %s16, 1
      %s22 = ssub.s32 %s16, 2
      %s29 = sadd.s32 1, %s24
      %p30 = scmp.ge.s32.totalorder %s29, 4
      %s31 = scalar_select %p30, 0, %s29
      %s32 = sadd.s32 1, %s23
      %s33 = scalar_select %p30, %s32, %s23
      %p34 = scmp.ge.s32.totalorder %s33, 4
      %s35 = scalar_select %p34, 0, %s33
      %s36 = ssub.s32 %s23, %s35
      %s37 = ssub.s32 %s24, %s31
      %s38 = sor.u32 %s36, %s37
      %p39 = scmp.eq.s32.totalorder %s38, 0
      %s41 = sadd.s32 %s40, 1
      %s42 = scalar_select %p39, %s40, %s41
      %p45 = pneg %p39
      %p46 = scmp.eq.s32.totalorder %s16, 15
      %p47 = por %p45, %p46
      %p48 = scmp.ne.s32.totalorder %s40, %s43
      %p49 = scmp.eq.s32.totalorder %s16, 0
      %p50 = por %p48, %p49
      %p51 = scmp.ne.s32.totalorder %s40, %s43
      %p52 = scmp.eq.s32.totalorder %s21, 15
      %p53 = por %p51, %p52
      %p54 = scmp.ne.s32.totalorder %s43, %s44
      %p55 = scmp.eq.s32.totalorder %s21, 0
      %p56 = por %p54, %p55
      %p57 = scmp.ne.s32.totalorder %s43, %s44
      %p58 = scmp.eq.s32.totalorder %s22, 15
      %p59 = por %p57, %p58
      %p61 = scmp.ne.s32.totalorder %s44, %s60
      %p62 = scmp.eq.s32.totalorder %s22, 0
      %p63 = por %p61, %p62
      %s64 = ssub.s32 %s23, %s35
      %p65 = scmp.eq.s32.totalorder %s64, 0
      %s67 = sadd.s32 %s66, 1
      %s68 = scalar_select %p65, %s66, %s67
      %p71 = pneg %p65
      %p72 = scmp.eq.s32.totalorder %s16, 15
      %p73 = por %p71, %p72
      %p74 = scmp.ne.s32.totalorder %s66, %s69
      %p75 = scmp.eq.s32.totalorder %s16, 0
      %p76 = por %p74, %p75
      %p77 = scmp.ne.s32.totalorder %s66, %s69
      %p78 = scmp.eq.s32.totalorder %s21, 15
      %p79 = por %p77, %p78
      %p80 = scmp.ne.s32.totalorder %s69, %s70
      %p81 = scmp.eq.s32.totalorder %s21, 0
      %p82 = por %p80, %p81
      %p83 = scmp.ne.s32.totalorder %s69, %s70
      %p84 = scmp.eq.s32.totalorder %s22, 15
      %p85 = por %p83, %p84
      %p87 = scmp.ne.s32.totalorder %s70, %s86
      %p88 = scmp.eq.s32.totalorder %s22, 0
      %p89 = por %p87, %p88
      %s90 = ssub.s32 %s23, %s35
      %p91 = scmp.eq.s32.totalorder %s90, 0
      %s93 = sadd.s32 %s92, 1
      %s94 = scalar_select %p91, %s92, %s93
      %p97 = pneg %p91
      %p98 = scmp.eq.s32.totalorder %s16, 15
      %p99 = por %p97, %p98
      %p100 = scmp.ne.s32.totalorder %s92, %s95
      %p101 = scmp.eq.s32.totalorder %s16, 0
      %p102 = por %p100, %p101
      %p103 = scmp.ne.s32.totalorder %s92, %s95
      %p104 = scmp.eq.s32.totalorder %s21, 15
      %p105 = por %p103, %p104
      %p106 = scmp.ne.s32.totalorder %s95, %s96
      %p107 = scmp.eq.s32.totalorder %s21, 0
      %p108 = por %p106, %p107
      %p109 = scmp.ne.s32.totalorder %s95, %s96
      %p110 = scmp.eq.s32.totalorder %s22, 15
      %p111 = por %p109, %p110
      %p113 = scmp.ne.s32.totalorder %s96, %s112
      %p114 = scmp.eq.s32.totalorder %s22, 0
      %p115 = por %p113, %p114
      %s116 = ssub.s32 %s23, %s35
      %p117 = scmp.eq.s32.totalorder %s116, 0
      %s119 = sadd.s32 %s118, 1
      %s120 = scalar_select %p117, %s118, %s119
      %p123 = pneg %p117
      %p124 = scmp.eq.s32.totalorder %s16, 15
      %p125 = por %p123, %p124
      %p126 = scmp.ne.s32.totalorder %s118, %s121
      %p127 = scmp.eq.s32.totalorder %s16, 0
      %p128 = por %p126, %p127
      %p129 = scmp.ne.s32.totalorder %s118, %s121
      %p130 = scmp.eq.s32.totalorder %s21, 15
      %p131 = por %p129, %p130
      %p132 = scmp.ne.s32.totalorder %s121, %s122
      %p133 = scmp.eq.s32.totalorder %s21, 0
      %p134 = por %p132, %p133
      %p135 = scmp.ne.s32.totalorder %s121, %s122
      %p136 = scmp.eq.s32.totalorder %s22, 15
      %p137 = por %p135, %p136
      %p139 = scmp.ne.s32.totalorder %s122, %s138
      %p140 = scmp.eq.s32.totalorder %s22, 0
      %p141 = por %p139, %p140
      %p142 = scmp.le.s32.totalorder 1, %s16
      %p143 = scmp.lt.s32.totalorder %s16, 17
      %p144 = pnand %p142, %p143
      %p145 = pneg %p144
      // Predicated region
      $region9: #{tpu_custom_call.1} parent=5 // pred_check
        _
      $region10: #{tpu_custom_call.1} parent=5 // pred_check_branch
        %147 = sbr.rel (%p144) target = $region12
      $region11: #{tpu_custom_call.1} parent=5 // pred_region
        %s148 = ssub.s32 %s16, 1
      $region12: #{tpu_custom_call.1} parent=5 // pred_fallthru
        _
      %p149 = scmp.lt.s32.totalorder %s16, 16
      // Predicated region
      $region13: #{tpu_custom_call.1} parent=5 // pred_check
        %p150 = pneg %p149
      $region14: #{tpu_custom_call.1} parent=5 // pred_check_branch
        %152 = sbr.rel (%p150) target = $region16
      $region15: #{tpu_custom_call.1} parent=5 // pred_region
        // Predicated region
        $region17: #{tpu_custom_call.1} parent=15 // pred_check
          %p153 = pneg %p50
        $region18: #{tpu_custom_call.1} parent=15 // pred_check_branch
          %155 = sbr.rel (%p153) target = $region20
        $region19: #{tpu_custom_call.1} parent=15 // pred_region
          %s156 = smul.u32 16, %s24
          %p157 = scmp.lt.s32.totalorder %s23, 3
          %s158 = scalar_select %p157, %s23, 3
          %p159 = scmp.lt.s32.totalorder %s156, 63
          %s160 = scalar_select %p159, %s156, 63
          %s161 = smul.addr %s158, 64
          %s162 = sadd.s32 %s160, %s161
          %s163 = smul.addr %s162, 4
          %s164 = scalar_lea.vmem %s0, %s163
          %s165 = smul.u32 16, %s24
        $region20: #{tpu_custom_call.1} parent=15 // pred_fallthru
          _
        // Predicated region
        $region21: #{tpu_custom_call.1} parent=15 // pred_check
          %p166 = pneg %p76
        $region22: #{tpu_custom_call.1} parent=15 // pred_check_branch
          %168 = sbr.rel (%p166) target = $region24
        $region23: #{tpu_custom_call.1} parent=15 // pred_region
          %p169 = scmp.lt.s32.totalorder %s23, 3
          %s170 = scalar_select %p169, %s23, 3
          %s171 = smul.addr %s170, 2
          %s172 = smul.addr %s171, 4
          %s173 = scalar_lea.vmem %s1, %s172
        $region24: #{tpu_custom_call.1} parent=15 // pred_fallthru
          _
      $region16: #{tpu_custom_call.1} parent=5 // pred_fallthru
        _
      %p174 = scmp.le.s32.totalorder 1, %s16
      %p175 = scmp.lt.s32.totalorder %s16, 17
      %p176 = pnand %p174, %p175
      %p177 = pneg %p176
      // Predicated region
      $region25: #{tpu_custom_call.1} parent=5 // pred_check
        _
      $region26: #{tpu_custom_call.1} parent=5 // pred_check_branch
        %179 = sbr.rel (%p176) target = $region28
      $region27: #{tpu_custom_call.1} parent=5 // pred_region
        %s180 = ssub.s32 %s16, 1
        %s181 = smul.u32 16, %s26
        %p182 = scmp.lt.s32.totalorder %s25, 3
        %s183 = scalar_select %p182, %s25, 3
        %p184 = scmp.lt.s32.totalorder %s181, 63
        %s185 = scalar_select %p184, %s181, 63
        %s186 = smul.addr %s183, 64
        %s187 = sadd.s32 %s185, %s186
        %s188 = smul.addr %s187, 4
        %s189 = scalar_lea.vmem %s0, %s188
        %p190 = pneg %p56
        %p191 = pneg %p53
        %p192 = scmp.lt.s32.totalorder %s25, 3
        %s193 = scalar_select %p192, %s25, 3
        %s194 = smul.addr %s193, 2
        %s195 = smul.addr %s194, 4
        %s196 = scalar_lea.vmem %s1, %s195
        %p197 = pneg %p82
        %p198 = pneg %p79
        %p199 = pneg %p108
        %p200 = pneg %p105
        %s201 = sand.u32 %s95, 1
        %s202 = scalar_lea.sflag [#allocation3], %s201
        %s203 = sand.u32 %s95, 1
        %s204 = scalar_lea.vmem [#allocation2], %s203
        %p205 = pneg %p134
        %p206 = pneg %p131
        %s207 = sand.u32 %s121, 1
        %s208 = scalar_lea.sflag [#allocation5], %s207
        %s209 = sand.u32 %s121, 1
        %s210 = scalar_lea.vmem [#allocation4], %s209
        %s211 = smul.u32 16, %s26
        %p212 = scmp.lt.s32.totalorder %s25, 3
        %s213 = scalar_select %p212, %s25, 3
        %p214 = scmp.lt.s32.totalorder %s211, 63
        %s215 = scalar_select %p214, %s211, 63
        %s216 = smul.addr %s213, 64
        %s217 = sadd.s32 %s215, %s216
        %s218 = smul.addr %s217, 4
        %s219 = scalar_lea.vmem %s0, %s218
        %s220 = smul.u32 16, %s26
        %p221 = scmp.lt.s32.totalorder %s25, 3
        %s222 = scalar_select %p221, %s25, 3
        %s223 = smul.addr %s222, 2
        %s224 = smul.addr %s223, 4
        %s225 = scalar_lea.vmem %s1, %s224
        %v227 = vld [vmem:[%s219] sm:$0xf]
        %v228 = vld [vmem:[%s219 + $0x4] sm:$0xf]
        %v229 = vld [vmem:[%s219 + $0x8] sm:$0xf]
        %v230 = vld [vmem:[%s219 + $0xc] sm:$0xf]
        %v231 = vld [vmem:[%s219 + $0x10] sm:$0xf]
        %v232 = vld [vmem:[%s219 + $0x14] sm:$0xf]
        %v233 = vld [vmem:[%s219 + $0x18] sm:$0xf]
        %v234 = vld [vmem:[%s219 + $0x1c] sm:$0xf]
        %v235 = vld [vmem:[%s219 + $0x20] sm:$0xf]
        %v236 = vld [vmem:[%s219 + $0x24] sm:$0xf]
        %v237 = vld [vmem:[%s219 + $0x28] sm:$0xf]
        %v238 = vld [vmem:[%s219 + $0x2c] sm:$0xf]
        %v239 = vld [vmem:[%s219 + $0x30] sm:$0xf]
        %v240 = vld [vmem:[%s219 + $0x34] sm:$0xf]
        %v241 = vld [vmem:[%s219 + $0x38] sm:$0xf]
        %v242 = vld [vmem:[%s219 + $0x3c] sm:$0xf]
        %v243 = vld [vmem:[%s225] sm:$0xf]
        %v244 = vld [vmem:[%s225 + $0x4] sm:$0xf]
        %v261 = vunpack.c.l.b16 %v227
        %v262 = vunpack.c.l.b16 %v228
        %v263 = vunpack.c.l.b16 %v229
        %v264 = vunpack.c.l.b16 %v230
        %v265 = vunpack.c.l.b16 %v231
        %v266 = vunpack.c.l.b16 %v232
        %v267 = vunpack.c.l.b16 %v233
        %v268 = vunpack.c.l.b16 %v234
        %v269 = vunpack.c.l.b16 %v235
        %v270 = vunpack.c.l.b16 %v236
        %v271 = vunpack.c.l.b16 %v237
        %v272 = vunpack.c.l.b16 %v238
        %v273 = vunpack.c.l.b16 %v239
        %v274 = vunpack.c.l.b16 %v240
        %v275 = vunpack.c.l.b16 %v241
        %v276 = vunpack.c.l.b16 %v242
        %v277 = vpack.c.b16 %v262, %v261
        %v278 = vpack.c.b16 %v264, %v263
        %v279 = vpack.c.b16 %v266, %v265
        %v280 = vpack.c.b16 %v268, %v267
        %v281 = vpack.c.b16 %v270, %v269
        %v282 = vpack.c.b16 %v272, %v271
        %v283 = vpack.c.b16 %v274, %v273
        %v284 = vpack.c.b16 %v276, %v275
        %v287 = vunpack.c.l.b16 %v243
        %v288 = vunpack.c.l.b16 %v244
        %v289 = vpack.c.b16 %v288, %v287
        %vm291 = vcmask 130048
        %v293 = vsel %vm291, %v277, 0
        %v296 = vsel %vm291, %v278, 0
        %v299 = vsel %vm291, %v279, 0
        %v302 = vsel %vm291, %v280, 0
        %v305 = vsel %vm291, %v281, 0
        %v308 = vsel %vm291, %v282, 0
        %v311 = vsel %vm291, %v283, 0
        %v314 = vsel %vm291, %v284, 0
        %316 = vmatpush.bf16.msra.mxu0 0
        %317 = vmatpush.bf16.msra.mxu0 0
        %318 = vmatpush.bf16.msra.mxu0 0
        %319 = vmatpush.bf16.msra.mxu0 0
        %320 = vmatpush.bf16.msra.mxu0 0
        %321 = vmatpush.bf16.msra.mxu0 0
        %322 = vmatpush.bf16.msra.mxu0 0
        %323 = vmatpush.bf16.msra.mxu0 %v289
        %324 = vmatmul.bf16.gmra.mxu0 %v293
        %v325 = vpop.f32.mrf.mxu0
        %v326 = vadd.f32 0.0, %v325
        %v327 = vpop.f32.mrf.mxu0
        %v328 = vadd.f32 0.0, %v327
        %329 = vmatmul.bf16.gmra.mxu0 %v296
        %v330 = vpop.f32.mrf.mxu0
        %v331 = vadd.f32 0.0, %v330
        %v332 = vpop.f32.mrf.mxu0
        %v333 = vadd.f32 0.0, %v332
        %334 = vmatmul.bf16.gmra.mxu0 %v299
        %v335 = vpop.f32.mrf.mxu0
        %v336 = vadd.f32 0.0, %v335
        %v337 = vpop.f32.mrf.mxu0
        %v338 = vadd.f32 0.0, %v337
        %339 = vmatmul.bf16.gmra.mxu0 %v302
        %v340 = vpop.f32.mrf.mxu0
        %v341 = vadd.f32 0.0, %v340
        %v342 = vpop.f32.mrf.mxu0
        %v343 = vadd.f32 0.0, %v342
        %344 = vmatmul.bf16.gmra.mxu0 %v305
        %v345 = vpop.f32.mrf.mxu0
        %v346 = vadd.f32 0.0, %v345
        %v347 = vpop.f32.mrf.mxu0
        %v348 = vadd.f32 0.0, %v347
        %349 = vmatmul.bf16.gmra.mxu0 %v308
        %v350 = vpop.f32.mrf.mxu0
        %v351 = vadd.f32 0.0, %v350
        %v352 = vpop.f32.mrf.mxu0
        %v353 = vadd.f32 0.0, %v352
        %354 = vmatmul.bf16.gmra.mxu0 %v311
        %v355 = vpop.f32.mrf.mxu0
        %v356 = vadd.f32 0.0, %v355
        %v357 = vpop.f32.mrf.mxu0
        %v358 = vadd.f32 0.0, %v357
        %359 = vmatmul.bf16.gmra.mxu0 %v314
        %v360 = vpop.f32.mrf.mxu0
        %v361 = vadd.f32 0.0, %v360
        %v362 = vpop.f32.mrf.mxu0
        %v363 = vadd.f32 0.0, %v362
        %364 = vdwg.mxu0
        %p365 = scmp.eq.s32.totalorder %s26, 0
        // Predicated region
        $region29: #{tpu_custom_call.1} parent=27 // pred_check
          %p366 = pneg %p365
        $region30: #{tpu_custom_call.1} parent=27 // pred_check_branch
          %368 = sbr.rel (%p366) target = $region32
        $region31: #{tpu_custom_call.1} parent=27 // pred_region
          %369 = vst [vmem:[%s204] sm:$0x1] 0.0
          %370 = vst [vmem:[%s210] sm:$0x1] 0.0
        $region32: #{tpu_custom_call.1} parent=27 // pred_fallthru
          _
        %v371 = vld [vmem:[%s204] sm:$0x1]
        %v372 = vadd.f32 %v326, %v328
        %v373 = vadd.f32 %v372, %v331
        %v374 = vadd.f32 %v373, %v333
        %v375 = vadd.f32 %v374, %v336
        %v376 = vadd.f32 %v375, %v338
        %v377 = vadd.f32 %v376, %v341
        %v378 = vadd.f32 %v377, %v343
        %v379 = vadd.f32 %v378, %v346
        %v380 = vadd.f32 %v379, %v348
        %v381 = vadd.f32 %v380, %v351
        %v382 = vadd.f32 %v381, %v353
        %v383 = vadd.f32 %v382, %v356
        %v384 = vadd.f32 %v383, %v358
        %v385 = vadd.f32 %v384, %v361
        %v386 = vadd.f32 %v385, %v363
        %v387 = vrot.slane %v386, 4
        %v388 = vadd.f32 %v386, %v387
        %v389 = vrot.slane %v388, 2
        %v390 = vadd.f32 %v388, %v389
        %v391 = vrot.slane %v390, 1
        %v392 = vadd.f32 %v390, %v391
        %v393 = vadd.f32 %v371, %v392
        %394 = vst [vmem:[%s204] sm:$0x1] %v393
        %v395 = vld [vmem:[%s210] sm:$0x1]
        %v396 = vmul.f32 %v326, %v326
        %v397 = vmul.f32 %v328, %v328
        %v398 = vmul.f32 %v331, %v331
        %v399 = vmul.f32 %v333, %v333
        %v400 = vmul.f32 %v336, %v336
        %v401 = vmul.f32 %v338, %v338
        %v402 = vmul.f32 %v341, %v341
        %v403 = vmul.f32 %v343, %v343
        %v404 = vmul.f32 %v346, %v346
        %v405 = vmul.f32 %v348, %v348
        %v406 = vmul.f32 %v351, %v351
        %v407 = vmul.f32 %v353, %v353
        %v408 = vmul.f32 %v356, %v356
        %v409 = vmul.f32 %v358, %v358
        %v410 = vmul.f32 %v361, %v361
        %v411 = vmul.f32 %v363, %v363
        %v412 = vadd.f32 %v396, %v397
        %v413 = vadd.f32 %v412, %v398
        %v414 = vadd.f32 %v413, %v399
        %v415 = vadd.f32 %v414, %v400
        %v416 = vadd.f32 %v415, %v401
        %v417 = vadd.f32 %v416, %v402
        %v418 = vadd.f32 %v417, %v403
        %v419 = vadd.f32 %v418, %v404
        %v420 = vadd.f32 %v419, %v405
        %v421 = vadd.f32 %v420, %v406
        %v422 = vadd.f32 %v421, %v407
        %v423 = vadd.f32 %v422, %v408
        %v424 = vadd.f32 %v423, %v409
        %v425 = vadd.f32 %v424, %v410
        %v426 = vadd.f32 %v425, %v411
        %v427 = vrot.slane %v426, 4
        %v428 = vadd.f32 %v426, %v427
        %v429 = vrot.slane %v428, 2
        %v430 = vadd.f32 %v428, %v429
        %v431 = vrot.slane %v430, 1
        %v432 = vadd.f32 %v430, %v431
        %v433 = vadd.f32 %v395, %v432
        %434 = vst [vmem:[%s210] sm:$0x1] %v433
        %s435 = sand.u32 %s95, 1
        %s436 = scalar_lea.sflag [#allocation3], %s435
        %s437 = sand.u32 %s95, 1
        %s438 = scalar_lea.vmem [#allocation2], %s437
        %s439 = sand.u32 %s121, 1
        %s440 = scalar_lea.sflag [#allocation5], %s439
        %s441 = sand.u32 %s121, 1
        %s442 = scalar_lea.vmem [#allocation4], %s441
        // Predicated region
        $region33: #{tpu_custom_call.1} parent=27 // pred_check
          %p443 = pneg %p105
        $region34: #{tpu_custom_call.1} parent=27 // pred_check_branch
          %445 = sbr.rel (%p443) target = $region36
        $region35: #{tpu_custom_call.1} parent=27 // pred_region
          %447 = vsyncadd %s436, 0
          %s448 = scalar_lea.hbm %s2, %s25
          %s450 = sshll.u32 %s438, 4
          %s451 = int_to_ptr.vmem [resolvable:$true] %s450
          %s452 = sshll.u32 %s448, 4
          %s453 = int_to_ptr.hbm [resolvable:$true] %s452
          %455 = dma.vmem_to_hbm [thread:$0]  %s451, 16, %s453, %s436
        $region36: #{tpu_custom_call.1} parent=27 // pred_fallthru
          _
        // Predicated region
        $region37: #{tpu_custom_call.1} parent=27 // pred_check
          %p456 = pneg %p131
        $region38: #{tpu_custom_call.1} parent=27 // pred_check_branch
          %458 = sbr.rel (%p456) target = $region40
        $region39: #{tpu_custom_call.1} parent=27 // pred_region
          %460 = vsyncadd %s440, 0
          %s461 = scalar_lea.hbm %s3, %s25
          %s463 = sshll.u32 %s442, 4
          %s464 = int_to_ptr.vmem [resolvable:$true] %s463
          %s465 = sshll.u32 %s461, 4
          %s466 = int_to_ptr.hbm [resolvable:$true] %s465
          %468 = dma.vmem_to_hbm [thread:$0]  %s464, 16, %s466, %s440
        $region40: #{tpu_custom_call.1} parent=27 // pred_fallthru
          _
      $region28: #{tpu_custom_call.1} parent=5 // pred_fallthru
        _
      %p469 = scmp.le.s32.totalorder 2, %s16
      // Predicated region
      $region41: #{tpu_custom_call.1} parent=5 // pred_check
        %p470 = pneg %p469
      $region42: #{tpu_custom_call.1} parent=5 // pred_check_branch
        %472 = sbr.rel (%p470) target = $region44
      $region43: #{tpu_custom_call.1} parent=5 // pred_region
        %s473 = ssub.s32 %s16, 2
        // Predicated region
        $region45: #{tpu_custom_call.1} parent=43 // pred_check
          %p474 = pneg %p111
        $region46: #{tpu_custom_call.1} parent=43 // pred_check_branch
          %476 = sbr.rel (%p474) target = $region48
        $region47: #{tpu_custom_call.1} parent=43 // pred_region
          %s477 = sand.u32 %s96, 1
          %s478 = scalar_lea.sflag [#allocation3], %s477
          %s479 = sand.u32 %s96, 1
          %s480 = scalar_lea.vmem [#allocation2], %s479
          %482 = dma.done %s478, 16
        $region48: #{tpu_custom_call.1} parent=43 // pred_fallthru
          _
        // Predicated region
        $region49: #{tpu_custom_call.1} parent=43 // pred_check
          %p483 = pneg %p137
        $region50: #{tpu_custom_call.1} parent=43 // pred_check_branch
          %485 = sbr.rel (%p483) target = $region52
        $region51: #{tpu_custom_call.1} parent=43 // pred_region
          %s486 = sand.u32 %s122, 1
          %s487 = scalar_lea.sflag [#allocation5], %s486
          %s488 = sand.u32 %s122, 1
          %s489 = scalar_lea.vmem [#allocation4], %s488
          %491 = dma.done %s487, 16
        $region52: #{tpu_custom_call.1} parent=43 // pred_fallthru
          _
      $region44: #{tpu_custom_call.1} parent=5 // pred_fallthru
        _
    $region6: #{tpu_custom_call.1} parent=1 // loop_footer
      %s20 = sadd.s32 1, %s16
    $region7: #{tpu_custom_call.1} parent=1 // loop_footer_branch
      %15 = sbr.rel target = $region3
    $region8: #{tpu_custom_call.1} parent=1 // loop_exit
      _
    %492 = vsyncpa [#allocation3], 1
    %s493 = scalar_lea.sflag [#allocation3], 1
    %494 = vsyncpa %s493, 1
    %495 = vsyncpa [#allocation5], 1
    %s496 = scalar_lea.sflag [#allocation5], 1
    %497 = vsyncpa %s496, 1

</llo_original>
